<compile_context>
chip_gen: v7x
topology: tpu7x:2x2x1
jax: 0.10.0
libtpu: 0.0.40
codegen_flags: <defaults>
</compile_context>

<pallas_src>
import functools

import numpy as np
import jax
import jax.numpy as jnp
from jax.experimental import pallas as pl
from jax.experimental.pallas import tpu as pltpu

LANES = 128
SUBLANES = 8
MAX_TILE_ROWS = 512  # 512 x 128 x 4 B = 256 KiB per f32 input buffer (x2 double-buffered)


def _cdiv(a, b):
    return -(-a // b)


def _round_up(x, m):
    return _cdiv(x, m) * m


def _fused_sums_kernel(chunk_block_ref, chunk_tensor_ref, chunk_local_ref,
                       x_ref, sum_ref, sq_ref):
    """One grid step = one (tile_rows, 128) chunk of one tensor.

    Accumulates per-lane partial sum / sum-of-squares into the lane-dense
    (1, 8, 128) output block belonging to that tensor (block stays resident in
    VMEM for all chunks of the tensor; VPU-only adds in the hot loop).
    """
    del chunk_block_ref, chunk_tensor_ref  # only used by the index_maps
    c = pl.program_id(0)

    # First chunk of a tensor: zero its accumulator block.
    @pl.when(chunk_local_ref[c] == 0)
    def _():
        sum_ref[...] = jnp.zeros_like(sum_ref)
        sq_ref[...] = jnp.zeros_like(sq_ref)

    x = x_ref[...].astype(jnp.float32)                  # (tile_rows, 128)
    xr = x.reshape(-1, SUBLANES, LANES)                 # (tile_rows//8, 8, 128)
    sum_ref[...] += jnp.sum(xr, axis=0).reshape(sum_ref.shape)
    sq_ref[...] += jnp.sum(xr * xr, axis=0).reshape(sq_ref.shape)


def _build_meta(shapes):
    """Static chunking metadata (pure python/numpy) from the tensor shapes."""
    sizes = [max(1, int(np.prod(s))) for s in shapes]
    rows = [_cdiv(n, LANES) for n in sizes]
    # Adaptive tile: big enough for the largest tensor (capped), multiple of 16
    # so bf16-packed tiles stay well-formed; at least one (16,128) tile.
    tile_rows = int(min(MAX_TILE_ROWS, max(16, _round_up(max(rows), 16))))
    chunks = [_cdiv(r, tile_rows) for r in rows]
    padded_elems = [c * tile_rows * LANES for c in chunks]
    block_off = np.cumsum([0] + chunks[:-1]).tolist()

    chunk_block, chunk_tensor, chunk_local = [], [], []
    for t, nct in enumerate(chunks):
        for loc in range(nct):
            chunk_block.append(block_off[t] + loc)
            chunk_tensor.append(t)
            chunk_local.append(loc)

    return dict(
        sizes=tuple(sizes),
        tile_rows=tile_rows,
        padded_elems=tuple(padded_elems),
        total_blocks=int(sum(chunks)),
        chunk_block=tuple(chunk_block),
        chunk_tensor=tuple(chunk_tensor),
        chunk_local=tuple(chunk_local),
    )


@functools.lru_cache(maxsize=None)
def _get_combined_fn(shapes_w, shapes_g, std_dev):
    """Builds a jitted forward for a fixed (weights, grads) shape signature."""
    meta = _build_meta(shapes_w + shapes_g)
    num_w = len(shapes_w)
    num_g = len(shapes_g)
    num_tensors = num_w + num_g
    tile_rows = meta["tile_rows"]
    num_chunks = len(meta["chunk_block"])

    chunk_block = np.asarray(meta["chunk_block"], np.int32)
    chunk_tensor = np.asarray(meta["chunk_tensor"], np.int32)
    chunk_local = np.asarray(meta["chunk_local"], np.int32)

    in_spec = pl.BlockSpec((tile_rows, LANES), lambda c, cb, ct, cl: (cb[c], 0))
    out_spec = lambda: pl.BlockSpec((1, SUBLANES, LANES),
                                    lambda c, cb, ct, cl: (ct[c], 0, 0))

    @jax.jit
    def run(weights, grads, lmbda_vn, lmbda_grad):
        tensors = list(weights) + list(grads)
        dt = jnp.result_type(*tensors)

        # Flatten (+ shift the weight tensors by their first element for a
        # numerically stable shifted one-pass variance), zero-pad each tensor to a
        # chunk multiple and concatenate into one lane-dense (rows, 128) slab.
        flats = []
        for t, x in enumerate(tensors):
            flat = x.reshape(-1).astype(dt)
            if t < num_w:
                flat = flat - flat[0]
            pad = meta["padded_elems"][t] - meta["sizes"][t]
            flats.append(jnp.pad(flat, (0, pad)))
        data = jnp.concatenate(flats).reshape(meta["total_blocks"] * tile_rows, LANES)

        sum_out, sq_out = pl.pallas_call(
            _fused_sums_kernel,
            out_shape=(
                jax.ShapeDtypeStruct((num_tensors, SUBLANES, LANES), jnp.float32),
                jax.ShapeDtypeStruct((num_tensors, SUBLANES, LANES), jnp.float32),
            ),
            grid_spec=pltpu.PrefetchScalarGridSpec(
                num_scalar_prefetch=3,
                grid=(num_chunks,),
                in_specs=[in_spec],
                out_specs=[out_spec(), out_spec()],
            ),
            compiler_params=pltpu.CompilerParams(
                dimension_semantics=("arbitrary",)),
        )(chunk_block, chunk_tensor, chunk_local, data)

        # Tiny final cross-lane reduce of the per-tensor (8,128) partials.
        sums = jnp.sum(sum_out, axis=(1, 2))   # (T,)  (weights: shifted sums)
        sqs = jnp.sum(sq_out, axis=(1, 2))     # (T,)
        ns = jnp.asarray(meta["sizes"], jnp.float32)

        # reg2 : inverse variance norm over the weights (population variance).
        s_w, q_w, n_w = sums[:num_w], sqs[:num_w], ns[:num_w]
        mean_w = s_w / n_w
        var_w = q_w / n_w - mean_w * mean_w      # == mean((mean(w) - w)^2)
        vn = lmbda_vn * jnp.sum(1.0 / var_w) / num_w
        if std_dev:
            vn = jnp.sqrt(vn)

        # reg1 : L2 gradient norm over (w_grads + a_grads).
        l2g = lmbda_grad * jnp.sum(sqs[num_w:]) / num_g

        return l2g + vn

    return run


def combined_reg(weights, w_grads, a_grads, *, lmbda_vn=0.01, lmbda_grad=0.001,
                 std_dev=False):
    """JAX/Pallas equivalent of CombinedReg.forward(weights, w_grads, a_grads)."""
    grads = list(w_grads) + list(a_grads)
    shapes_w = tuple(tuple(int(d) for d in w.shape) for w in weights)
    shapes_g = tuple(tuple(int(d) for d in g.shape) for g in grads)
    fn = _get_combined_fn(shapes_w, shapes_g, bool(std_dev))
    return fn(tuple(weights), tuple(grads),
              jnp.float32(lmbda_vn), jnp.float32(lmbda_grad))


def _reference(weights, w_grads, a_grads, lmbda_vn, lmbda_grad, std_dev=False):
    """Pure-JAX reference mirroring the PyTorch modules (two-pass variance)."""
    reg_vn = jnp.float32(0.0)
    for w in weights:
        w = w.astype(jnp.float32)
        var = jnp.mean((jnp.mean(w) - w) ** 2)
        reg_vn = reg_vn + 1.0 / var
    vn = jnp.float32(lmbda_vn) * reg_vn / len(weights)
    if std_dev:
        vn = jnp.sqrt(vn)
    grads = list(w_grads) + list(a_grads)
    l2 = jnp.float32(0.0)
    for g in grads:
        l2 = l2 + jnp.sum(g.astype(jnp.float32) ** 2)
    l2 = jnp.float32(lmbda_grad) * l2 / len(grads)
    return vn + l2


if __name__ == "__main__":
    key = jax.random.PRNGKey(0)
    ks = jax.random.split(key, 10)

    # Small deterministic "model state": conv(4ch,3x3) + linear(32->16), batch=2.
    weights = [
        jax.random.normal(ks[0], (4, 4, 3, 3), jnp.float32) * 0.5,   # conv weight
        jax.random.normal(ks[1], (4,), jnp.float32) * 0.1,           # conv bias
        jax.random.normal(ks[2], (32, 16), jnp.float32) * 0.2,       # linear weight
        jax.random.normal(ks[3], (16,), jnp.float32) * 0.1,          # linear bias
    ]
    w_grads = [
        jax.random.normal(ks[4], (4, 4, 3, 3), jnp.float32) * 0.05,
        jax.random.normal(ks[5], (4,), jnp.float32) * 0.01,
        jax.random.normal(ks[6], (32, 16), jnp.float32) * 0.02,
        jax.random.normal(ks[7], (16,), jnp.float32) * 0.01,
    ]
    a_grads = [
        jax.random.normal(ks[8], (2, 4, 16, 16), jnp.float32) * 0.1,  # conv act grad
        jax.random.normal(ks[9], (2, 32), jnp.float32) * 0.1,         # linear act grad
    ]

    lmbda_vn, lmbda_grad = 0.01, 0.001

    out = combined_reg(weights, w_grads, a_grads,
                       lmbda_vn=lmbda_vn, lmbda_grad=lmbda_grad, std_dev=False)
    out = jax.block_until_ready(out)

    out_sd = combined_reg(weights, w_grads, a_grads,
                          lmbda_vn=lmbda_vn, lmbda_grad=lmbda_grad, std_dev=True)
    out_sd = jax.block_until_ready(out_sd)

    ref = jax.block_until_ready(
        _reference(weights, w_grads, a_grads, lmbda_vn, lmbda_grad, std_dev=False))
    ref_sd = jax.block_until_ready(
        _reference(weights, w_grads, a_grads, lmbda_vn, lmbda_grad, std_dev=True))

    assert np.isfinite(float(out)) and np.isfinite(float(out_sd))
    np.testing.assert_allclose(float(out), float(ref), rtol=5e-2)
    np.testing.assert_allclose(float(out_sd), float(ref_sd), rtol=5e-2)

    print("KERNEL_OK")
</pallas_src>

<mosaic_0001>
module attributes {stable_mosaic.version = 11 : i64} {
  func.func @_fused_sums_kernel(%arg0: i32, %arg1: memref<10xi32, #tpu.memory_space<smem>>, %arg2: memref<10xi32, #tpu.memory_space<smem>>, %arg3: memref<10xi32, #tpu.memory_space<smem>>, %arg4: memref<16x128xf32, #tpu.memory_space<vmem>>, %arg5: memref<1x8x128xf32, #tpu.memory_space<vmem>>, %arg6: memref<1x8x128xf32, #tpu.memory_space<vmem>>) attributes {dimension_semantics = [#tpu.dimension_semantics<arbitrary>], iteration_bounds = array<i64: 10>, scalar_prefetch = 3 : i64, scratch_operands = 0 : i64, tpu.core_type = #tpu.core_type<tc>, window_params = [{transform_indices = @transform_0, window_bounds = array<i64: 16, 128>}, {transform_indices = @transform_1, window_bounds = array<i64: 1, 8, 128>}, {transform_indices = @transform_2, window_bounds = array<i64: 1, 8, 128>}]} {
    %0 = arith.index_cast %arg0 : i32 to index
    %1 = memref.load %arg3[%0] : memref<10xi32, #tpu.memory_space<smem>>
    %c0_i32 = arith.constant 0 : i32
    %2 = arith.cmpi eq, %1, %c0_i32 : i32
    %3 = arith.extui %2 : i1 to i32
    %c0_i32_0 = arith.constant 0 : i32
    %4 = arith.cmpi ne, %3, %c0_i32_0 : i32
    scf.if %4 {
      %cst_15 = arith.constant 0.000000e+00 : f32
      %18 = vector.broadcast %cst_15 : f32 to vector<1x8x128xf32>
      %c0_16 = arith.constant 0 : index
      %c0_17 = arith.constant 0 : index
      %c0_18 = arith.constant 0 : index
      %19 = vector.load %arg5[%c0_16, %c0_17, %c0_18] : memref<1x8x128xf32, #tpu.memory_space<vmem>>, vector<1x8x128xf32>
      tpu.vector_store %arg5[%c0_16, %c0_17, %c0_18], %18 {strides = array<i32>} : memref<1x8x128xf32, #tpu.memory_space<vmem>>, vector<1x8x128xf32>,
      %cst_19 = arith.constant 0.000000e+00 : f32
      %20 = vector.broadcast %cst_19 : f32 to vector<1x8x128xf32>
      %c0_20 = arith.constant 0 : index
      %c0_21 = arith.constant 0 : index
      %c0_22 = arith.constant 0 : index
      %21 = vector.load %arg6[%c0_20, %c0_21, %c0_22] : memref<1x8x128xf32, #tpu.memory_space<vmem>>, vector<1x8x128xf32>
      tpu.vector_store %arg6[%c0_20, %c0_21, %c0_22], %20 {strides = array<i32>} : memref<1x8x128xf32, #tpu.memory_space<vmem>>, vector<1x8x128xf32>,
    } else {
    }
    %c0 = arith.constant 0 : index
    %c0_1 = arith.constant 0 : index
    %5 = vector.load %arg4[%c0, %c0_1] : memref<16x128xf32, #tpu.memory_space<vmem>>, vector<16x128xf32>
    %6 = vector.shape_cast %5 : vector<16x128xf32> to vector<2x8x128xf32>
    %c0_2 = arith.constant 0 : index
    %c0_3 = arith.constant 0 : index
    %c0_4 = arith.constant 0 : index
    %7 = vector.load %arg5[%c0_2, %c0_3, %c0_4] : memref<1x8x128xf32, #tpu.memory_space<vmem>>, vector<1x8x128xf32>
    %cst = arith.constant dense<0.000000e+00> : vector<8x128xf32>
    %8 = vector.multi_reduction <add>, %6, %cst [0] : vector<2x8x128xf32> to vector<8x128xf32>
    %9 = vector.shape_cast %8 : vector<8x128xf32> to vector<1x8x128xf32>
    %10 = arith.addf %7, %9 : vector<1x8x128xf32>
    %c0_5 = arith.constant 0 : index
    %c0_6 = arith.constant 0 : index
    %c0_7 = arith.constant 0 : index
    %11 = vector.load %arg5[%c0_5, %c0_6, %c0_7] : memref<1x8x128xf32, #tpu.memory_space<vmem>>, vector<1x8x128xf32>
    tpu.vector_store %arg5[%c0_5, %c0_6, %c0_7], %10 {strides = array<i32>} : memref<1x8x128xf32, #tpu.memory_space<vmem>>, vector<1x8x128xf32>,
    %c0_8 = arith.constant 0 : index
    %c0_9 = arith.constant 0 : index
    %c0_10 = arith.constant 0 : index
    %12 = vector.load %arg6[%c0_8, %c0_9, %c0_10] : memref<1x8x128xf32, #tpu.memory_space<vmem>>, vector<1x8x128xf32>
    %13 = arith.mulf %6, %6 : vector<2x8x128xf32>
    %cst_11 = arith.constant dense<0.000000e+00> : vector<8x128xf32>
    %14 = vector.multi_reduction <add>, %13, %cst_11 [0] : vector<2x8x128xf32> to vector<8x128xf32>
    %15 = vector.shape_cast %14 : vector<8x128xf32> to vector<1x8x128xf32>
    %16 = arith.addf %12, %15 : vector<1x8x128xf32>
    %c0_12 = arith.constant 0 : index
    %c0_13 = arith.constant 0 : index
    %c0_14 = arith.constant 0 : index
    %17 = vector.load %arg6[%c0_12, %c0_13, %c0_14] : memref<1x8x128xf32, #tpu.memory_space<vmem>>, vector<1x8x128xf32>
    tpu.vector_store %arg6[%c0_12, %c0_13, %c0_14], %16 {strides = array<i32>} : memref<1x8x128xf32, #tpu.memory_space<vmem>>, vector<1x8x128xf32>,
    return
  }
  func.func @transform_0(%arg0: i32, %arg1: memref<10xi32, #tpu.memory_space<smem>>, %arg2: memref<10xi32, #tpu.memory_space<smem>>, %arg3: memref<10xi32, #tpu.memory_space<smem>>) -> (i32, i32) {
    %0 = arith.index_cast %arg0 : i32 to index
    %1 = memref.load %arg1[%0] : memref<10xi32, #tpu.memory_space<smem>>
    %c0_i32 = arith.constant 0 : i32
    %c0_i32_0 = arith.constant 0 : i32
    return %1, %c0_i32 : i32, i32
  }
  func.func @transform_1(%arg0: i32, %arg1: memref<10xi32, #tpu.memory_space<smem>>, %arg2: memref<10xi32, #tpu.memory_space<smem>>, %arg3: memref<10xi32, #tpu.memory_space<smem>>) -> (i32, i32, i32) {
    %0 = arith.index_cast %arg0 : i32 to index
    %1 = memref.load %arg2[%0] : memref<10xi32, #tpu.memory_space<smem>>
    %c0_i32 = arith.constant 0 : i32
    %c0_i32_0 = arith.constant 0 : i32
    %c0_i32_1 = arith.constant 0 : i32
    return %1, %c0_i32, %c0_i32_0 : i32, i32, i32
  }
  func.func @transform_2(%arg0: i32, %arg1: memref<10xi32, #tpu.memory_space<smem>>, %arg2: memref<10xi32, #tpu.memory_space<smem>>, %arg3: memref<10xi32, #tpu.memory_space<smem>>) -> (i32, i32, i32) {
    %0 = arith.index_cast %arg0 : i32 to index
    %1 = memref.load %arg2[%0] : memref<10xi32, #tpu.memory_space<smem>>
    %c0_i32 = arith.constant 0 : i32
    %c0_i32_0 = arith.constant 0 : i32
    %c0_i32_1 = arith.constant 0 : i32
    return %1, %c0_i32, %c0_i32_0 : i32, i32, i32
  }
}

</mosaic_0001>

<llo_original>
// kernel: run.1
$region0: #{run.1}
  #allocation0 [shape = 'u32[]', space=smem, size = 0x4, offset = 0x4, fixed_abs, tag = 'smem constant byte address 0x4 - core index']
  #allocation1 [shape = 'u32[144,128]{1,0:T(1,128)}', space=vmem, size = 0x12000, scoped, tag = 'internal scratch']
  #allocation2 [shape = 's32[1]{0}', space=sflag, size = 0x4, scoped, tag = 'scoped memory for run.1']
  #allocation3 [shape = 'u8[512]{0}', space=smem, size = 0x200, scoped, tag = 'prefetched SMEM operand 0']
  #allocation4 [shape = 'u8[512]{0}', space=smem, size = 0x200, scoped, tag = 'prefetched SMEM operand 1']
  #allocation5 [shape = 'u8[512]{0}', space=smem, size = 0x200, scoped, tag = 'prefetched SMEM operand 2']
  %s0 = inlined_call_operand.vmem [shape: s32[10], index: 0, kind: input, shape index: {}, may-alias: {0,1}]
  %s1 = inlined_call_operand.vmem [shape: s32[10], index: 1, kind: input, shape index: {}, may-alias: {0,1}]
  %s2 = inlined_call_operand.vmem [shape: s32[10], index: 2, kind: input, shape index: {}]
  %s3 = inlined_call_operand.vmem [shape: f32[160,128], index: 3, kind: input, shape index: {}]
  %s4 = inlined_call_operand.vmem [shape: f32[10,8,128], index: 4, kind: output, shape index: {0}]
  %s5 = inlined_call_operand.vmem [shape: f32[10,8,128], index: 5, kind: output, shape index: {1}]
  %6 = xla_tuple %s4, %s5
  %s7 = sld [smem:[#allocation0]]
  $region49: #{run.1} parent=0
    _
  %s9 = ssub.s32 1, %s7
  %s10 = scalar_select 0, %s9, %s7
  %s11 = sshll.u32 %s0, 4
  %s12 = int_to_ptr.vmem [resolvable:$true] %s11
  %14 = dma.vmem_to_smem %s12, 16, [#allocation3], [#allocation2]
  %s15 = sshll.u32 %s1, 4
  %s16 = int_to_ptr.vmem [resolvable:$true] %s15
  %18 = dma.vmem_to_smem %s16, 16, [#allocation4], [#allocation2]
  %s19 = sshll.u32 %s2, 4
  %s20 = int_to_ptr.vmem [resolvable:$true] %s19
  %22 = dma.vmem_to_smem %s20, 16, [#allocation5], [#allocation2]
  %23 = dma.done [#allocation2], 48
  %24 = sfence
  loop: start=0, step=1, limit=12
  $region2: #{run.1} parent=0 // loop_pre_header
    _
  $region3: #{run.1} parent=0 // loop_header
    %s26 = sphi 0, %s30
    %p27 = scmp.ge.s32.totalorder %s26, 12
    %s38 = sphi 0, %s40
    %s41 = sphi 0, %s38
    %s42 = sphi 0, %s41
    %s58 = sphi 0, %s42
    %s66 = sphi 0, %s68
    %s69 = sphi 0, %s66
    %s70 = sphi 0, %s69
    %s86 = sphi 0, %s70
    %s94 = sphi 0, %s96
    %s97 = sphi 0, %s94
    %s98 = sphi 0, %s97
    %s114 = sphi 0, %s98
  $region4: #{run.1} parent=0 // loop_header_branch
    %29 = sbr.rel (%p27) target = $region8
  $region5: #{run.1} parent=0 // loop_body
    %s31 = ssub.s32 %s26, 1
    %s32 = ssub.s32 %s26, 2
    %s33 = sadd.s32 %s26, 1
    %s34 = sld [smem:[#allocation3 + %s26]]
    %s35 = sld [smem:[#allocation3 + %s33]]
    %s36 = ssub.s32 %s34, %s35
    %p37 = scmp.eq.s32.totalorder %s36, 0
    %s39 = sadd.s32 %s38, 1
    %s40 = scalar_select %p37, %s38, %s39
    %p43 = pneg %p37
    %p44 = scmp.eq.s32.totalorder %s26, 9
    %p45 = por %p43, %p44
    %p46 = scmp.ne.s32.totalorder %s38, %s41
    %p47 = scmp.eq.s32.totalorder %s26, 0
    %p48 = por %p46, %p47
    %p49 = scmp.ne.s32.totalorder %s38, %s41
    %p50 = scmp.eq.s32.totalorder %s31, 9
    %p51 = por %p49, %p50
    %p52 = scmp.ne.s32.totalorder %s41, %s42
    %p53 = scmp.eq.s32.totalorder %s31, 0
    %p54 = por %p52, %p53
    %p55 = scmp.ne.s32.totalorder %s41, %s42
    %p56 = scmp.eq.s32.totalorder %s32, 9
    %p57 = por %p55, %p56
    %p59 = scmp.ne.s32.totalorder %s42, %s58
    %p60 = scmp.eq.s32.totalorder %s32, 0
    %p61 = por %p59, %p60
    %s62 = sld [smem:[#allocation4 + %s26]]
    %s63 = sld [smem:[#allocation4 + %s33]]
    %s64 = ssub.s32 %s62, %s63
    %p65 = scmp.eq.s32.totalorder %s64, 0
    %s67 = sadd.s32 %s66, 1
    %s68 = scalar_select %p65, %s66, %s67
    %p71 = pneg %p65
    %p72 = scmp.eq.s32.totalorder %s26, 9
    %p73 = por %p71, %p72
    %p74 = scmp.ne.s32.totalorder %s66, %s69
    %p75 = scmp.eq.s32.totalorder %s26, 0
    %p76 = por %p74, %p75
    %p77 = scmp.ne.s32.totalorder %s66, %s69
    %p78 = scmp.eq.s32.totalorder %s31, 9
    %p79 = por %p77, %p78
    %p80 = scmp.ne.s32.totalorder %s69, %s70
    %p81 = scmp.eq.s32.totalorder %s31, 0
    %p82 = por %p80, %p81
    %p83 = scmp.ne.s32.totalorder %s69, %s70
    %p84 = scmp.eq.s32.totalorder %s32, 9
    %p85 = por %p83, %p84
    %p87 = scmp.ne.s32.totalorder %s70, %s86
    %p88 = scmp.eq.s32.totalorder %s32, 0
    %p89 = por %p87, %p88
    %s90 = sld [smem:[#allocation4 + %s26]]
    %s91 = sld [smem:[#allocation4 + %s33]]
    %s92 = ssub.s32 %s90, %s91
    %p93 = scmp.eq.s32.totalorder %s92, 0
    %s95 = sadd.s32 %s94, 1
    %s96 = scalar_select %p93, %s94, %s95
    %p99 = pneg %p93
    %p100 = scmp.eq.s32.totalorder %s26, 9
    %p101 = por %p99, %p100
    %p102 = scmp.ne.s32.totalorder %s94, %s97
    %p103 = scmp.eq.s32.totalorder %s26, 0
    %p104 = por %p102, %p103
    %p105 = scmp.ne.s32.totalorder %s94, %s97
    %p106 = scmp.eq.s32.totalorder %s31, 9
    %p107 = por %p105, %p106
    %p108 = scmp.ne.s32.totalorder %s97, %s98
    %p109 = scmp.eq.s32.totalorder %s31, 0
    %p110 = por %p108, %p109
    %p111 = scmp.ne.s32.totalorder %s97, %s98
    %p112 = scmp.eq.s32.totalorder %s32, 9
    %p113 = por %p111, %p112
    %p115 = scmp.ne.s32.totalorder %s98, %s114
    %p116 = scmp.eq.s32.totalorder %s32, 0
    %p117 = por %p115, %p116
    %p118 = scmp.le.s32.totalorder 1, %s26
    %p119 = scmp.lt.s32.totalorder %s26, 11
    %p120 = pnand %p118, %p119
    %p121 = pneg %p120
    // Predicated region
    $region9: #{run.1} parent=5 // pred_check
      _
    $region10: #{run.1} parent=5 // pred_check_branch
      %123 = sbr.rel (%p120) target = $region12
    $region11: #{run.1} parent=5 // pred_region
      %s124 = ssub.s32 %s26, 1
    $region12: #{run.1} parent=5 // pred_fallthru
      _
    %p125 = scmp.lt.s32.totalorder %s26, 10
    // Predicated region
    $region13: #{run.1} parent=5 // pred_check
      %p126 = pneg %p125
    $region14: #{run.1} parent=5 // pred_check_branch
      %128 = sbr.rel (%p126) target = $region16
    $region15: #{run.1} parent=5 // pred_region
      // Predicated region
      $region17: #{run.1} parent=15 // pred_check
        %p129 = pneg %p48
      $region18: #{run.1} parent=15 // pred_check_branch
        %131 = sbr.rel (%p129) target = $region20
      $region19: #{run.1} parent=15 // pred_region
        %s132 = sld [smem:[#allocation3 + %s26]]
        %s133 = smul.u32 2, %s132
        %p134 = scmp.lt.s32.totalorder %s133, 19
        %s135 = scalar_select %p134, %s133, 19
        %s136 = smul.addr %s135, 8
        %s137 = scalar_lea.vmem %s3, %s136
        %s138 = sld [smem:[#allocation3 + %s26]]
        %s139 = smul.u32 2, %s138
      $region20: #{run.1} parent=15 // pred_fallthru
        _
    $region16: #{run.1} parent=5 // pred_fallthru
      _
    %p140 = scmp.le.s32.totalorder 1, %s26
    %p141 = scmp.lt.s32.totalorder %s26, 11
    %p142 = pnand %p140, %p141
    %p143 = pneg %p142
    // Predicated region
    $region21: #{run.1} parent=5 // pred_check
      _
    $region22: #{run.1} parent=5 // pred_check_branch
      %145 = sbr.rel (%p142) target = $region24
    $region23: #{run.1} parent=5 // pred_region
      %s146 = ssub.s32 %s26, 1
      %s147 = sld [smem:[#allocation3 + %s31]]
      %s148 = smul.u32 2, %s147
      %p149 = scmp.lt.s32.totalorder %s148, 19
      %s150 = scalar_select %p149, %s148, 19
      %s151 = smul.addr %s150, 8
      %s152 = scalar_lea.vmem %s3, %s151
      %p153 = pneg %p54
      %p154 = pneg %p51
      %p155 = pneg %p82
      %p156 = pneg %p79
      %s157 = sld [smem:[#allocation4 + %s31]]
      %p158 = scmp.lt.s32.totalorder %s157, 9
      %s159 = scalar_select %p158, %s157, 9
      %s160 = smul.addr %s159, 8
      %s161 = scalar_lea.vmem %s4, %s160
      %p162 = pneg %p110
      %p163 = pneg %p107
      %s164 = sld [smem:[#allocation4 + %s31]]
      %p165 = scmp.lt.s32.totalorder %s164, 9
      %s166 = scalar_select %p165, %s164, 9
      %s167 = smul.addr %s166, 8
      %s168 = scalar_lea.vmem %s5, %s167
      %s169 = sld [smem:[#allocation3 + %s31]]
      %s170 = smul.u32 2, %s169
      %p171 = scmp.lt.s32.totalorder %s170, 19
      %s172 = scalar_select %p171, %s170, 19
      %s173 = smul.addr %s172, 8
      %s174 = scalar_lea.vmem %s3, %s173
      %s175 = sld [smem:[#allocation3 + %s31]]
      %s176 = smul.u32 2, %s175
      %s177 = sld [smem:[#allocation4 + %s31]]
      %p178 = scmp.lt.s32.totalorder %s177, 9
      %s179 = scalar_select %p178, %s177, 9
      %s180 = smul.addr %s179, 8
      %s181 = scalar_lea.vmem %s4, %s180
      %s182 = sld [smem:[#allocation4 + %s31]]
      %s183 = sld [smem:[#allocation4 + %s31]]
      %p184 = scmp.lt.s32.totalorder %s183, 9
      %s185 = scalar_select %p184, %s183, 9
      %s186 = smul.addr %s185, 8
      %s187 = scalar_lea.vmem %s5, %s186
      %s188 = sld [smem:[#allocation4 + %s31]]
      %s189 = sld [smem:[#allocation5 + %s31]]
      %p190 = scmp.eq.s32.totalorder %s189, 0
      // Predicated region
      $region25: #{run.1} parent=23 // pred_check
        %p191 = pneg %p190
      $region26: #{run.1} parent=23 // pred_check_branch
        %193 = sbr.rel (%p191) target = $region28
      $region27: #{run.1} parent=23 // pred_region
        %194 = vst [vmem:[%s181] sm:$0xff] 0.0
        %195 = vst [vmem:[%s187] sm:$0xff] 0.0
      $region28: #{run.1} parent=23 // pred_fallthru
        _
      %v196 = vld [vmem:[%s174] sm:$0xff]
      %v197 = vld [vmem:[%s174 + $0x8] sm:$0xff]
      %v198 = vld [vmem:[%s181] sm:$0xff]
      %v199 = vadd.f32 %v196, %v197
      %v200 = vadd.f32 %v198, %v199
      %201 = vst [vmem:[%s181] sm:$0xff] %v200
      %v202 = vld [vmem:[%s187] sm:$0xff]
      %v203 = vmul.f32 %v196, %v196
      %v204 = vmul.f32 %v197, %v197
      %v205 = vadd.f32 %v203, %v204
      %v206 = vadd.f32 %v202, %v205
      %207 = vst [vmem:[%s187] sm:$0xff] %v206
      %s208 = sld [smem:[#allocation4 + %s31]]
      %p209 = scmp.lt.s32.totalorder %s208, 9
      %s210 = scalar_select %p209, %s208, 9
      %s211 = smul.addr %s210, 8
      %s212 = scalar_lea.vmem %s4, %s211
      %s213 = sld [smem:[#allocation4 + %s31]]
      %p214 = scmp.lt.s32.totalorder %s213, 9
      %s215 = scalar_select %p214, %s213, 9
      %s216 = smul.addr %s215, 8
      %s217 = scalar_lea.vmem %s5, %s216
      // Predicated region
      $region29: #{run.1} parent=23 // pred_check
        %p218 = pneg %p79
      $region30: #{run.1} parent=23 // pred_check_branch
        %220 = sbr.rel (%p218) target = $region32
      $region31: #{run.1} parent=23 // pred_region
        %s221 = sld [smem:[#allocation4 + %s31]]
      $region32: #{run.1} parent=23 // pred_fallthru
        _
      // Predicated region
      $region33: #{run.1} parent=23 // pred_check
        %p222 = pneg %p107
      $region34: #{run.1} parent=23 // pred_check_branch
        %224 = sbr.rel (%p222) target = $region36
      $region35: #{run.1} parent=23 // pred_region
        %s225 = sld [smem:[#allocation4 + %s31]]
      $region36: #{run.1} parent=23 // pred_fallthru
        _
    $region24: #{run.1} parent=5 // pred_fallthru
      _
    %p226 = scmp.le.s32.totalorder 2, %s26
    // Predicated region
    $region37: #{run.1} parent=5 // pred_check
      %p227 = pneg %p226
    $region38: #{run.1} parent=5 // pred_check_branch
      %229 = sbr.rel (%p227) target = $region40
    $region39: #{run.1} parent=5 // pred_region
      %s230 = ssub.s32 %s26, 2
      // Predicated region
      $region41: #{run.1} parent=39 // pred_check
        %p231 = pneg %p85
      $region42: #{run.1} parent=39 // pred_check_branch
        %233 = sbr.rel (%p231) target = $region44
      $region43: #{run.1} parent=39 // pred_region
        %s234 = sld [smem:[#allocation4 + %s32]]
        %p235 = scmp.lt.s32.totalorder %s234, 9
        %s236 = scalar_select %p235, %s234, 9
        %s237 = smul.addr %s236, 8
        %s238 = scalar_lea.vmem %s4, %s237
      $region44: #{run.1} parent=39 // pred_fallthru
        _
      // Predicated region
      $region45: #{run.1} parent=39 // pred_check
        %p239 = pneg %p113
      $region46: #{run.1} parent=39 // pred_check_branch
        %241 = sbr.rel (%p239) target = $region48
      $region47: #{run.1} parent=39 // pred_region
        %s242 = sld [smem:[#allocation4 + %s32]]
        %p243 = scmp.lt.s32.totalorder %s242, 9
        %s244 = scalar_select %p243, %s242, 9
        %s245 = smul.addr %s244, 8
        %s246 = scalar_lea.vmem %s5, %s245
      $region48: #{run.1} parent=39 // pred_fallthru
        _
    $region40: #{run.1} parent=5 // pred_fallthru
      _
  $region6: #{run.1} parent=0 // loop_footer
    %s30 = sadd.s32 1, %s26
  $region7: #{run.1} parent=0 // loop_footer_branch
    %25 = sbr.rel target = $region3
  $region8: #{run.1} parent=0 // loop_exit
    _

</llo_original>
